<compile_context>
chip_gen: v6e
topology: v6e:2x2x1
jax: 0.10.0
libtpu: 0.0.40
codegen_flags: <defaults>
</compile_context>

<pallas_src>
import jax
import jax.numpy as jnp
from jax import lax
from jax.experimental import pallas as pl
from jax.experimental.pallas import tpu as pltpu

IN_FEATURES = 84
OUT_FEATURES = 8


def _fc_kernel(x_ref, w_ref, b_ref, o_ref):
    # x_ref: (tb, 84)   w_ref: (8, 84) (PyTorch layout)   b_ref: (8, 1)
    # o_ref: (8, tb)  -- transposed output tile: batch rows live on the lanes,
    #                    so stores are unmasked and the writeback DMA is dense.
    y_t = lax.dot_general(
        x_ref[...].T if False else w_ref[...], x_ref[...],
        dimension_numbers=(((1,), (1,)), ((), ())),   # contract shared K = 84
        preferred_element_type=jnp.float32,
    )                                                 # -> (8, tb)
    o_ref[...] = (y_t + b_ref[...]).astype(o_ref.dtype)


def _round_up(n, m):
    return ((n + m - 1) // m) * m


def base_fc_forward(x, weight, bias, *, block_rows=8192, xla_fastpath_rows=1024):
    """y = x @ weight.T + bias.

    x: (B, 84) f32; weight: (8, 84) f32 (PyTorch layout); bias: (8,) f32.
    """
    x = jnp.asarray(x, jnp.float32)
    weight = jnp.asarray(weight, jnp.float32)
    bias = jnp.asarray(bias, jnp.float32)
    B = x.shape[0]

    # Small-batch fast path: one fused XLA dot beats a 1-step grid of pure
    # launch / DMA-setup overhead.
    if B < xla_fastpath_rows:
        return x @ weight.T + bias

    # Batch tile.  No full-array padding:
    #  * B <= block_rows: a single exact block (block_shape == array shape
    #    satisfies the (8,128) tiling rules via the "equals full dim" escape).
    #  * B  > block_rows: tile with a 128-multiple (lane-dense transposed out
    #    tile) and let Pallas handle the ragged last block.
    if B <= block_rows:
        tb = B
    else:
        tb = max(128, _round_up(min(block_rows, B), 128))
    grid = (pl.cdiv(B, tb),)

    bias_col = bias.reshape(OUT_FEATURES, 1)

    cost = pl.CostEstimate(
        flops=2 * B * IN_FEATURES * OUT_FEATURES,
        bytes_accessed=(B * IN_FEATURES * 4          # x read (rows contiguous)
                        + OUT_FEATURES * IN_FEATURES * 4
                        + OUT_FEATURES * 4
                        + B * OUT_FEATURES * 4),     # dense (8, B) writeback
        transcendentals=0,
    )

    out_t = pl.pallas_call(
        _fc_kernel,
        out_shape=jax.ShapeDtypeStruct((OUT_FEATURES, B), jnp.float32),
        grid_spec=pltpu.PrefetchScalarGridSpec(
            num_scalar_prefetch=0,
            grid=grid,
            in_specs=[
                # Streamed batch tiles (default 2-deep pipelining).
                pl.BlockSpec((tb, IN_FEATURES), lambda i: (i, 0)),
                # Grid-invariant operands: constant index maps keep them
                # resident in VMEM across all batch tiles.
                pl.BlockSpec((OUT_FEATURES, IN_FEATURES), lambda i: (0, 0)),
                pl.BlockSpec((OUT_FEATURES, 1), lambda i: (0, 0)),
            ],
            # Lane-dense output: last dim is the batch tile -> unmasked vst,
            # dense writeback DMA, tiny (8*tb*4 B) output VMEM buffers.
            out_specs=pl.BlockSpec((OUT_FEATURES, tb), lambda i: (0, i)),
        ),
        compiler_params=pltpu.CompilerParams(
            # Batch tiles are independent: shard across v7x's two TensorCores
            # (no-op on single-TC v5e/v6e).
            dimension_semantics=("parallel",),
            # Each x buffer is lane-padded to tb*128*4 B (84 -> 128 lanes):
            # 2-deep buffering at tb=8192 is ~8.5 MiB; 32 MiB leaves headroom
            # for 16k-row tiles and is within every generation's physical VMEM.
            vmem_limit_bytes=32 * 1024 * 1024,
        ),
        cost_estimate=cost,
    )(x, weight, bias_col)

    # (8, B) -> (B, 8); 8*B*4 bytes, tiny relative to the 84*B*4-byte x read.
    return out_t.T


def _init_params(key):
    # Deterministic init mimicking nn.Linear(84, 8) default
    # (uniform(-1/sqrt(in), 1/sqrt(in)) for both weight and bias).
    k_w, k_b = jax.random.split(key)
    bound = 1.0 / jnp.sqrt(float(IN_FEATURES))
    weight = jax.random.uniform(k_w, (OUT_FEATURES, IN_FEATURES), jnp.float32,
                                -bound, bound)
    bias = jax.random.uniform(k_b, (OUT_FEATURES,), jnp.float32, -bound, bound)
    return weight, bias


if __name__ == "__main__":
    key = jax.random.PRNGKey(0)
    k_x, k_p, k_x2 = jax.random.split(key, 3)
    weight, bias = _init_params(k_p)

    # Primary small-shape run (batch=2, features=84); force the Pallas path.
    batch = 2
    x = jax.random.normal(k_x, (batch, IN_FEATURES), jnp.float32)
    y = jax.block_until_ready(base_fc_forward(x, weight, bias,
                                              xla_fastpath_rows=0))
    y_ref = x @ weight.T + bias
    assert y.shape == (batch, OUT_FEATURES)
    assert jnp.allclose(y, y_ref, atol=1e-5, rtol=1e-5)

    # Multi-tile Pallas path with a ragged last block (300 = 2*128 + 44).
    x2 = jax.random.normal(k_x2, (300, IN_FEATURES), jnp.float32)
    y2 = jax.block_until_ready(base_fc_forward(x2, weight, bias,
                                               block_rows=128,
                                               xla_fastpath_rows=0))
    y2_ref = x2 @ weight.T + bias
    assert y2.shape == (300, OUT_FEATURES)
    assert jnp.allclose(y2, y2_ref, atol=1e-5, rtol=1e-5)

    # Default small-batch XLA fast path should agree as well.
    y3 = jax.block_until_ready(base_fc_forward(x, weight, bias))
    assert jnp.allclose(y3, y_ref, atol=1e-5, rtol=1e-5)

    print("KERNEL_OK")
</pallas_src>

<mosaic_0001>
module attributes {stable_mosaic.version = 11 : i64} {
  func.func @_fc_kernel(%arg0: i32, %arg1: memref<2x84xf32, #tpu.memory_space<vmem>>, %arg2: memref<8x84xf32, #tpu.memory_space<vmem>>, %arg3: memref<8x1xf32, #tpu.memory_space<vmem>>, %arg4: memref<8x2xf32, #tpu.memory_space<vmem>>) attributes {dimension_semantics = [#tpu.dimension_semantics<parallel>], iteration_bounds = array<i64: 1>, scalar_prefetch = 0 : i64, scratch_operands = 0 : i64, tpu.core_type = #tpu.core_type<tc>, window_params = [{transform_indices = @transform_0, window_bounds = array<i64: 2, 84>}, {pipeline_mode = #tpu.pipeline_mode<synchronous>, transform_indices = @transform_1, window_bounds = array<i64: 8, 84>}, {pipeline_mode = #tpu.pipeline_mode<synchronous>, transform_indices = @transform_2, window_bounds = array<i64: 8, 1>}, {transform_indices = @transform_3, window_bounds = array<i64: 8, 2>}]} {
    %c0 = arith.constant 0 : index
    %c0_0 = arith.constant 0 : index
    %0 = vector.load %arg2[%c0, %c0_0] : memref<8x84xf32, #tpu.memory_space<vmem>>, vector<8x84xf32>
    %c0_1 = arith.constant 0 : index
    %c0_2 = arith.constant 0 : index
    %1 = vector.load %arg1[%c0_1, %c0_2] : memref<2x84xf32, #tpu.memory_space<vmem>>, vector<2x84xf32>
    %cst = arith.constant dense<0.000000e+00> : vector<8x2xf32>
    %2 = tpu.matmul %0, %1, %cst {dimension_numbers = #tpu.dot_dimension_numbers<[1], [1], [0], [0], [0, 0, 1, 0], [], []>} : vector<8x84xf32>, vector<2x84xf32>, vector<8x2xf32> -> vector<8x2xf32>
    %c0_3 = arith.constant 0 : index
    %c0_4 = arith.constant 0 : index
    %3 = vector.load %arg3[%c0_3, %c0_4] : memref<8x1xf32, #tpu.memory_space<vmem>>, vector<8x1xf32>
    %4 = vector.broadcast %3 : vector<8x1xf32> to vector<8x2xf32>
    %5 = arith.addf %2, %4 : vector<8x2xf32>
    %c0_5 = arith.constant 0 : index
    %c0_6 = arith.constant 0 : index
    %6 = vector.load %arg4[%c0_5, %c0_6] : memref<8x2xf32, #tpu.memory_space<vmem>>, vector<8x2xf32>
    tpu.vector_store %arg4[%c0_5, %c0_6], %5 {strides = array<i32>} : memref<8x2xf32, #tpu.memory_space<vmem>>, vector<8x2xf32>,
    return
  }
  func.func @transform_0(%arg0: i32) -> (i32, i32) {
    %c0_i32 = arith.constant 0 : i32
    %c0_i32_0 = arith.constant 0 : i32
    return %arg0, %c0_i32 : i32, i32
  }
  func.func @transform_1(%arg0: i32) -> (i32, i32) {
    %c0_i32 = arith.constant 0 : i32
    %c0_i32_0 = arith.constant 0 : i32
    %c0_i32_1 = arith.constant 0 : i32
    return %c0_i32, %c0_i32_0 : i32, i32
  }
  func.func @transform_2(%arg0: i32) -> (i32, i32) {
    %c0_i32 = arith.constant 0 : i32
    %c0_i32_0 = arith.constant 0 : i32
    %c0_i32_1 = arith.constant 0 : i32
    return %c0_i32, %c0_i32_0 : i32, i32
  }
  func.func @transform_3(%arg0: i32) -> (i32, i32) {
    %c0_i32 = arith.constant 0 : i32
    %c0_i32_0 = arith.constant 0 : i32
    return %c0_i32, %arg0 : i32, i32
  }
}

</mosaic_0001>

<llo_original>
// kernel: tpu_custom_call.1
$region0: #{tpu_custom_call.1}
  #allocation0 [shape = 'u32[]', space=smem, size = 0x4, offset = 0x4, fixed_abs, tag = 'smem constant byte address 0x4 - core index']
  #allocation1 [shape = 'u32[144,128]{1,0:T(1,128)}', space=vmem, size = 0x12000, scoped, tag = 'internal scratch']
  %s0 = inlined_call_operand.vmem [shape: f32[2,84], index: 0, kind: input, shape index: {}]
  %s1 = inlined_call_operand.vmem [shape: f32[8,84], index: 1, kind: input, shape index: {}]
  %s2 = inlined_call_operand.vmem [shape: f32[8,1], index: 2, kind: input, shape index: {}]
  %s3 = inlined_call_operand.vmem [shape: f32[8,2], index: 3, kind: output, shape index: {}]
  %s4 = sld [smem:[#allocation0]]
  $region22: #{tpu_custom_call.1} parent=0
    _
  %s6 = ssub.s32 1, %s4
  %s7 = scalar_select 0, %s6, %s4
  // Predicated region
  $region2: #{tpu_custom_call.1} parent=0 // pred_check
    _
  $region3: #{tpu_custom_call.1} parent=0 // pred_check_branch
    %9 = sbr.rel (0) target = $region5
  $region4: #{tpu_custom_call.1} parent=0 // pred_region
    _
  $region5: #{tpu_custom_call.1} parent=0 // pred_fallthru
    _
  // Predicated region
  $region6: #{tpu_custom_call.1} parent=0 // pred_check
    _
  $region7: #{tpu_custom_call.1} parent=0 // pred_check_branch
    %11 = sbr.rel (0) target = $region9
  $region8: #{tpu_custom_call.1} parent=0 // pred_region
    _
  $region9: #{tpu_custom_call.1} parent=0 // pred_fallthru
    _
  // Predicated region
  $region10: #{tpu_custom_call.1} parent=0 // pred_check
    _
  $region11: #{tpu_custom_call.1} parent=0 // pred_check_branch
    %13 = sbr.rel (0) target = $region13
  $region12: #{tpu_custom_call.1} parent=0 // pred_region
    _
  $region13: #{tpu_custom_call.1} parent=0 // pred_fallthru
    _
  %v14 = vld [vmem:[%s1] sm:$0xff]
  %v15 = vld [vmem:[%s0] sm:$0x3]
  %v16 = vld [vmem:[%s2] sm:$0xff]
  %18 = vset.pattern.permute.xlu0 0
  %19 = vperm.xlu0 %18, %v16
  %v20 = vpop.permute.xlu0 %19
  %vm22 = vcmask 687104
  %v24 = vsel %vm22, %v14, 0
  %v27 = vsel %vm22, %v15, 0
  %29 = vmatprep.subr.mxu0 0.0
  %30 = vmatpush1.xpose.msra.mxu0 0.0
  %31 = vmatprep.subr.mxu0 0.0
  %32 = vmatpush1.xpose.msra.mxu0 0.0
  %33 = vmatprep.subr.mxu0 0.0
  %34 = vmatpush1.xpose.msra.mxu0 0.0
  %35 = vmatprep.subr.mxu0 0.0
  %36 = vmatpush1.xpose.msra.mxu0 0.0
  %37 = vmatprep.subr.mxu0 0.0
  %38 = vmatpush1.xpose.msra.mxu0 0.0
  %39 = vmatprep.subr.mxu0 0.0
  %40 = vmatpush1.xpose.msra.mxu0 0.0
  %41 = vmatprep.subr.mxu0 0.0
  %42 = vmatpush1.xpose.msra.mxu0 0.0
  %43 = vmatprep.subr.mxu0 0.0
  %44 = vmatpush1.xpose.msra.mxu0 0.0
  %45 = vmatprep.subr.mxu0 0.0
  %46 = vmatpush1.xpose.msra.mxu0 0.0
  %47 = vmatprep.subr.mxu0 0.0
  %48 = vmatpush1.xpose.msra.mxu0 0.0
  %49 = vmatprep.subr.mxu0 0.0
  %50 = vmatpush1.xpose.msra.mxu0 0.0
  %51 = vmatprep.subr.mxu0 0.0
  %52 = vmatpush1.xpose.msra.mxu0 0.0
  %53 = vmatprep.subr.mxu0 0.0
  %54 = vmatpush1.xpose.msra.mxu0 0.0
  %55 = vmatprep.subr.mxu0 0.0
  %56 = vmatpush1.xpose.msra.mxu0 0.0
  %57 = vmatprep.subr.mxu0 0.0
  %58 = vmatpush1.xpose.msra.mxu0 0.0
  %59 = vmatprep.subr.mxu0 0.0
  %60 = vmatpush1.xpose.msra.mxu0 %v27
  %61 = vmatprep.subr.mxu0 0.0
  %62 = vmatpush2.xpose.msra.mxu0 0.0
  %63 = vmatprep.subr.mxu0 0.0
  %64 = vmatpush2.xpose.msra.mxu0 0.0
  %65 = vmatprep.subr.mxu0 0.0
  %66 = vmatpush2.xpose.msra.mxu0 0.0
  %67 = vmatprep.subr.mxu0 0.0
  %68 = vmatpush2.xpose.msra.mxu0 0.0
  %69 = vmatprep.subr.mxu0 0.0
  %70 = vmatpush2.xpose.msra.mxu0 0.0
  %71 = vmatprep.subr.mxu0 0.0
  %72 = vmatpush2.xpose.msra.mxu0 0.0
  %73 = vmatprep.subr.mxu0 0.0
  %74 = vmatpush2.xpose.msra.mxu0 0.0
  %75 = vmatprep.subr.mxu0 0.0
  %76 = vmatpush2.xpose.msra.mxu0 0.0
  %77 = vmatprep.subr.mxu0 0.0
  %78 = vmatpush2.xpose.msra.mxu0 0.0
  %79 = vmatprep.subr.mxu0 0.0
  %80 = vmatpush2.xpose.msra.mxu0 0.0
  %81 = vmatprep.subr.mxu0 0.0
  %82 = vmatpush2.xpose.msra.mxu0 0.0
  %83 = vmatprep.subr.mxu0 0.0
  %84 = vmatpush2.xpose.msra.mxu0 0.0
  %85 = vmatprep.subr.mxu0 0.0
  %86 = vmatpush2.xpose.msra.mxu0 0.0
  %87 = vmatprep.subr.mxu0 0.0
  %88 = vmatpush2.xpose.msra.mxu0 0.0
  %89 = vmatprep.subr.mxu0 0.0
  %90 = vmatpush2.xpose.msra.mxu0 0.0
  %91 = vmatprep.subr.mxu0 0.0
  %92 = vmatpush2.xpose.msra.mxu0 0.0
  %93 = vmatprep.mubr.f32.mxu0 0.0
  %94 = vmatmul.mubr.f32.gmra.mxu0 %v24
  %v95 = vpop.f32.mrf.mxu0
  %v96 = vadd.f32 %v20, %v95
  %v97 = vpop.f32.mrf.mxu0
  %98 = vdwg.mxu0
  %vm99 = vcmask 15360
  %100 = vst.msk [vmem:[%s3] sm:$0xff] %vm99, %v96
  // Predicated region
  $region14: #{tpu_custom_call.1} parent=0 // pred_check
    _
  $region15: #{tpu_custom_call.1} parent=0 // pred_check_branch
    %102 = sbr.rel (0) target = $region17
  $region16: #{tpu_custom_call.1} parent=0 // pred_region
    _
  $region17: #{tpu_custom_call.1} parent=0 // pred_fallthru
    _
  // Predicated region
  $region18: #{tpu_custom_call.1} parent=0 // pred_check
    _
  $region19: #{tpu_custom_call.1} parent=0 // pred_check_branch
    %104 = sbr.rel (0) target = $region21
  $region20: #{tpu_custom_call.1} parent=0 // pred_region
    _
  $region21: #{tpu_custom_call.1} parent=0 // pred_fallthru
    _

</llo_original>
